<compile_context>
chip_gen: v6e
topology: v6e:2x2x1
jax: 0.10.0
libtpu: 0.0.40
codegen_flags: <defaults>
</compile_context>

<pallas_src>
import jax
import jax.numpy as jnp
from jax.experimental import pallas as pl
from jax.experimental.pallas import tpu as pltpu

LANES = 128
SUBLANES = 8


def _round_up(x, m):
    return (x + m - 1) // m * m


def _make_mse_kernel(total_rows, block_rows, needs_mask, inv_n):
    """Build the streaming sum((real-pred)^2) kernel for static tile params."""

    def kernel(pred_ref, real_ref, out_ref, acc_ref):
        step = pl.program_id(0)

        @pl.when(step == 0)
        def _():
            acc_ref[...] = jnp.zeros_like(acc_ref)

        # Upcast on the VPU; inputs stream through in their native dtype.
        d = real_ref[...].astype(jnp.float32) - pred_ref[...].astype(jnp.float32)
        sq = d * d

        if needs_mask:
            # Ragged tail block: rows past `total_rows` contain garbage (the
            # DMA only fills the valid region) -- zero them before folding.
            row_ids = jax.lax.broadcasted_iota(jnp.int32, (block_rows, LANES), 0)
            valid = (row_ids + step * block_rows) < total_rows
            sq = jnp.where(valid, sq, 0.0)

        # Fold (block_rows, 128) into the (8, 128) vreg accumulator: pure VPU
        # vector adds, no per-step cross-lane reduce.
        acc_ref[...] += sq.reshape(-1, SUBLANES, LANES).sum(axis=0)

        @pl.when(step == pl.num_programs(0) - 1)
        def _():
            # Single cross-lane reduce + normalization, once per call.
            out_ref[...] = (jnp.sum(acc_ref[...]) * inv_n).reshape(1, 1)

    return kernel


def mse(pred, real, *, rows_per_block=4096):
    """MSE(pred, real) = sum((real - pred)^2) / numel, via Pallas on TPU.

    rows_per_block: rows (of 128 lanes) per grid step.  4096 rows = 2 MiB f32
    per input per pipeline buffer; consider ~8192 on v7x.
    """
    assert pred.shape == real.shape, "pred/real must have identical shapes"
    n_true = pred.size
    assert n_true > 0

    # Rows of 128 lanes needed; guarantee at least one full (8, 128) tile so
    # block shapes never exceed the array's sublane extent.
    rows = max(-(-n_true // LANES), SUBLANES)

    pred_flat = pred.reshape(-1)
    real_flat = real.reshape(-1)
    n_slab = rows * LANES
    if n_slab != n_true:
        # TODO(synk): lane-ragged sizes still need one small padded copy to
        # present a (rows, 128) lane-dense slab; a fully copy-free path would
        # require manual 1-D DMA of the <1024-element tail.
        n_pad = n_slab - n_true  # zero padding is exact for a sum of squares
        pred_flat = jnp.pad(pred_flat, (0, n_pad))
        real_flat = jnp.pad(real_flat, (0, n_pad))
    pred2d = pred_flat.reshape(rows, LANES)   # free bitcast when no pad needed
    real2d = real_flat.reshape(rows, LANES)

    # Block rows: multiple of 8, never larger than the array, capped by
    # rows_per_block.  Any ragged tail is handled by a masked partial block.
    max_block = _round_up(rows_per_block, SUBLANES)
    block_rows = min(max_block, (rows // SUBLANES) * SUBLANES)
    steps = -(-rows // block_rows)
    needs_mask = (rows % block_rows) != 0

    # Triple-buffer the inputs only when there are enough steps to benefit.
    n_buffers = 3 if steps >= 3 else 2

    def in_index_map(i):
        return (i, 0)

    if n_buffers != 2:
        try:
            in_spec = pl.BlockSpec((block_rows, LANES), in_index_map,
                                   pipeline_mode=pl.Buffered(n_buffers))
        except TypeError:  # older jax without pipeline_mode
            n_buffers = 2
            in_spec = pl.BlockSpec((block_rows, LANES), in_index_map)
    else:
        in_spec = pl.BlockSpec((block_rows, LANES), in_index_map)

    # VMEM budget: inputs x pipeline buffers + f32 diff/square temporaries
    # (independent of input dtype) + slack.  Capped well under v7x's 64 MiB.
    elem_bytes = jnp.dtype(pred2d.dtype).itemsize
    tile_in_bytes = block_rows * LANES * elem_bytes
    tile_f32_bytes = block_rows * LANES * 4
    vmem_limit = 2 * n_buffers * tile_in_bytes + 2 * tile_f32_bytes + (4 << 20)
    vmem_limit = int(max(16 << 20, min(vmem_limit, 48 << 20)))

    kernel = _make_mse_kernel(rows, block_rows, needs_mask, 1.0 / float(n_true))

    out = pl.pallas_call(
        kernel,
        out_shape=jax.ShapeDtypeStruct((1, 1), jnp.float32),
        grid_spec=pltpu.PrefetchScalarGridSpec(
            num_scalar_prefetch=0,
            grid=(steps,),
            in_specs=[in_spec, in_spec],
            out_specs=pl.BlockSpec((1, 1), lambda i: (0, 0)),
            scratch_shapes=[pltpu.VMEM((SUBLANES, LANES), jnp.float32)],
        ),
        compiler_params=pltpu.CompilerParams(
            dimension_semantics=("arbitrary",),
            vmem_limit_bytes=vmem_limit,
        ),
    )(pred2d, real2d)

    return out[0, 0]


if __name__ == "__main__":
    key = jax.random.PRNGKey(0)

    def ref_mse(pred, real):
        p = pred.astype(jnp.float32).reshape(-1)
        r = real.astype(jnp.float32).reshape(-1)
        return jnp.sum((r - p) ** 2) / p.size

    cases = [
        # (shape, dtype, kwargs)
        ((2, 4, 16, 16), jnp.float32, {}),                  # aligned, single block (module shape)
        ((2, 4, 16, 16), jnp.bfloat16, {}),                 # native bf16 in, f32 upcast in-kernel
        ((17, 128), jnp.float32, {"rows_per_block": 8}),    # multi-step + masked ragged tail
        ((32, 4, 32, 32), jnp.float32, {"rows_per_block": 256}),  # multi-step, triple-buffered
        ((3, 5, 7), jnp.float32, {}),                       # lane-ragged -> minimal pad path
    ]

    for idx, (shape, dtype, kw) in enumerate(cases):
        kp, kr = jax.random.split(jax.random.fold_in(key, idx))
        pred = jax.random.normal(kp, shape, dtype=jnp.float32).astype(dtype)
        real = jax.random.normal(kr, shape, dtype=jnp.float32).astype(dtype)

        got = jax.block_until_ready(mse(pred, real, **kw))
        want = ref_mse(pred, real)
        assert jnp.allclose(got, want, rtol=1e-5, atol=1e-6), (shape, dtype, got, want)

    print("KERNEL_OK")
</pallas_src>

<mosaic_0001>
module attributes {stable_mosaic.version = 11 : i64} {
  func.func @kernel(%arg0: i32, %arg1: memref<16x128xf32, #tpu.memory_space<vmem>>, %arg2: memref<16x128xf32, #tpu.memory_space<vmem>>, %arg3: memref<1x1xf32, #tpu.memory_space<vmem>>, %arg4: memref<8x128xf32, #tpu.memory_space<vmem>>) attributes {dimension_semantics = [#tpu.dimension_semantics<arbitrary>], iteration_bounds = array<i64: 1>, scalar_prefetch = 0 : i64, scratch_operands = 1 : i64, tpu.core_type = #tpu.core_type<tc>, window_params = [{transform_indices = @transform_0, window_bounds = array<i64: 16, 128>}, {transform_indices = @transform_1, window_bounds = array<i64: 16, 128>}, {pipeline_mode = #tpu.pipeline_mode<synchronous>, transform_indices = @transform_2, window_bounds = array<i64: 1, 1>}]} {
    %c0_i32 = arith.constant 0 : i32
    %0 = arith.cmpi eq, %arg0, %c0_i32 : i32
    %1 = arith.extui %0 : i1 to i32
    %c0_i32_0 = arith.constant 0 : i32
    %2 = arith.cmpi ne, %1, %c0_i32_0 : i32
    scf.if %2 {
      %cst_10 = arith.constant 0.000000e+00 : f32
      %15 = vector.broadcast %cst_10 : f32 to vector<8x128xf32>
      %c0_11 = arith.constant 0 : index
      %c0_12 = arith.constant 0 : index
      %16 = vector.load %arg4[%c0_11, %c0_12] : memref<8x128xf32, #tpu.memory_space<vmem>>, vector<8x128xf32>
      tpu.vector_store %arg4[%c0_11, %c0_12], %15 {strides = array<i32>} : memref<8x128xf32, #tpu.memory_space<vmem>>, vector<8x128xf32>,
    } else {
    }
    %c0 = arith.constant 0 : index
    %c0_1 = arith.constant 0 : index
    %3 = vector.load %arg2[%c0, %c0_1] : memref<16x128xf32, #tpu.memory_space<vmem>>, vector<16x128xf32>
    %c0_2 = arith.constant 0 : index
    %c0_3 = arith.constant 0 : index
    %4 = vector.load %arg1[%c0_2, %c0_3] : memref<16x128xf32, #tpu.memory_space<vmem>>, vector<16x128xf32>
    %5 = arith.subf %3, %4 : vector<16x128xf32>
    %6 = arith.mulf %5, %5 : vector<16x128xf32>
    %c0_4 = arith.constant 0 : index
    %c0_5 = arith.constant 0 : index
    %7 = vector.load %arg4[%c0_4, %c0_5] : memref<8x128xf32, #tpu.memory_space<vmem>>, vector<8x128xf32>
    %8 = vector.shape_cast %6 : vector<16x128xf32> to vector<2x8x128xf32>
    %cst = arith.constant dense<0.000000e+00> : vector<8x128xf32>
    %9 = vector.multi_reduction <add>, %8, %cst [0] : vector<2x8x128xf32> to vector<8x128xf32>
    %10 = arith.addf %7, %9 : vector<8x128xf32>
    %c0_6 = arith.constant 0 : index
    %c0_7 = arith.constant 0 : index
    %11 = vector.load %arg4[%c0_6, %c0_7] : memref<8x128xf32, #tpu.memory_space<vmem>>, vector<8x128xf32>
    tpu.vector_store %arg4[%c0_6, %c0_7], %10 {strides = array<i32>} : memref<8x128xf32, #tpu.memory_space<vmem>>, vector<8x128xf32>,
    %c0_i32_8 = arith.constant 0 : i32
    %12 = arith.cmpi eq, %arg0, %c0_i32_8 : i32
    %13 = arith.extui %12 : i1 to i32
    %c0_i32_9 = arith.constant 0 : i32
    %14 = arith.cmpi ne, %13, %c0_i32_9 : i32
    scf.if %14 {
      %c0_10 = arith.constant 0 : index
      %c0_11 = arith.constant 0 : index
      %15 = vector.load %arg4[%c0_10, %c0_11] : memref<8x128xf32, #tpu.memory_space<vmem>>, vector<8x128xf32>
      %16 = vector.shape_cast %15 : vector<8x128xf32> to vector<1x8x128xf32>
      %cst_12 = arith.constant dense<0.000000e+00> : vector<1xf32>
      %17 = vector.multi_reduction <add>, %16, %cst_12 [1, 2] : vector<1x8x128xf32> to vector<1xf32>
      %18 = vector.shape_cast %17 : vector<1xf32> to vector<1x1x1xf32>
      %19 = vector.extract %18[0, 0, 0] : f32 from vector<1x1x1xf32>
      %cst_13 = arith.constant 4.8828125E-4 : f32
      %20 = arith.mulf %19, %cst_13 : f32
      %21 = vector.broadcast %20 : f32 to vector<1x1xf32>
      %c0_14 = arith.constant 0 : index
      %c0_15 = arith.constant 0 : index
      %22 = vector.load %arg3[%c0_14, %c0_15] : memref<1x1xf32, #tpu.memory_space<vmem>>, vector<1x1xf32>
      tpu.vector_store %arg3[%c0_14, %c0_15], %21 {strides = array<i32>} : memref<1x1xf32, #tpu.memory_space<vmem>>, vector<1x1xf32>,
    } else {
    }
    return
  }
  func.func @transform_0(%arg0: i32) -> (i32, i32) {
    %c0_i32 = arith.constant 0 : i32
    %c0_i32_0 = arith.constant 0 : i32
    return %arg0, %c0_i32 : i32, i32
  }
  func.func @transform_1(%arg0: i32) -> (i32, i32) {
    %c0_i32 = arith.constant 0 : i32
    %c0_i32_0 = arith.constant 0 : i32
    return %arg0, %c0_i32 : i32, i32
  }
  func.func @transform_2(%arg0: i32) -> (i32, i32) {
    %c0_i32 = arith.constant 0 : i32
    %c0_i32_0 = arith.constant 0 : i32
    %c0_i32_1 = arith.constant 0 : i32
    return %c0_i32, %c0_i32_0 : i32, i32
  }
}

</mosaic_0001>

<llo_original>
// kernel: tpu_custom_call.1
$region0: #{tpu_custom_call.1}
  #allocation0 [shape = 'u32[]', space=smem, size = 0x4, offset = 0x4, fixed_abs, tag = 'smem constant byte address 0x4 - core index']
  #allocation1 [shape = 'u32[144,128]{1,0:T(1,128)}', space=vmem, size = 0x12000, scoped, tag = 'internal scratch']
  #allocation2 [shape = 'f32[8,128]{1,0:T(8,128)}', space=vmem, size = 0x1000, scoped, tag = 'scratch operand']
  %s0 = inlined_call_operand.hbm [shape: f32[16,128], index: 0, kind: input, shape index: {}]
  %s1 = inlined_call_operand.hbm [shape: f32[16,128], index: 1, kind: input, shape index: {}]
  %s2 = inlined_call_operand.hbm [shape: f32[1,1], index: 2, kind: output, shape index: {}]
  %s3 = sld [smem:[#allocation0]]
  $region34: #{tpu_custom_call.1} parent=0
    _
  %s5 = ssub.s32 1, %s3
  %s6 = scalar_select 0, %s5, %s3
  $region1: #{tpu_custom_call.1} parent=0
    #allocation3 [shape = 'u8[8192]{0}', space=vmem, size = 0x2000, scoped, tag = 'input window, operand 0, single buffered']
    #allocation4 [shape = 's32[1]{0}', space=sflag, size = 0x4, scoped, tag = 'scoped memory for tpu_custom_call.1']
    #allocation5 [shape = 's32[1]{0}', space=sflag, size = 0x4, scoped, tag = 'scoped memory for tpu_custom_call.1']
    #allocation6 [shape = 'u8[8192]{0}', space=vmem, size = 0x2000, scoped, tag = 'input window, operand 1, single buffered']
    #allocation7 [shape = 's32[1]{0}', space=sflag, size = 0x4, scoped, tag = 'scoped memory for tpu_custom_call.1']
    #allocation8 [shape = 'u8[512]{0}', space=vmem, size = 0x400, scoped, tag = 'output window, operand 0, single buffered']
    %7 = vsyncpa [#allocation4], 0
    %8 = vsyncpa [#allocation7], 0
    %9 = vsyncpa [#allocation5], 0
    // Predicated region
    $region2: #{tpu_custom_call.1} parent=1 // pred_check
      _
    $region3: #{tpu_custom_call.1} parent=1 // pred_check_branch
      %11 = sbr.rel (0) target = $region5
    $region4: #{tpu_custom_call.1} parent=1 // pred_region
      %s13 = ssub.s32 256, 256
      %14 = vsyncadd [#allocation4], %s13
      %s15 = sshll.u32 [#allocation3], 4
      %s16 = int_to_ptr.vmem [resolvable:$true] %s15
      %21 = dma.hbm_to_vmem [thread:$0]  %s0, 256, %s16, [#allocation4], 128, 128, 8
    $region5: #{tpu_custom_call.1} parent=1 // pred_fallthru
      _
    // Predicated region
    $region6: #{tpu_custom_call.1} parent=1 // pred_check
      _
    $region7: #{tpu_custom_call.1} parent=1 // pred_check_branch
      %23 = sbr.rel (0) target = $region9
    $region8: #{tpu_custom_call.1} parent=1 // pred_region
      %s25 = ssub.s32 256, 256
      %26 = vsyncadd [#allocation7], %s25
      %s27 = sshll.u32 [#allocation6], 4
      %s28 = int_to_ptr.vmem [resolvable:$true] %s27
      %33 = dma.hbm_to_vmem [thread:$0]  %s1, 256, %s28, [#allocation7], 128, 128, 8
    $region9: #{tpu_custom_call.1} parent=1 // pred_fallthru
      _
    // Predicated region
    $region10: #{tpu_custom_call.1} parent=1 // pred_check
      _
    $region11: #{tpu_custom_call.1} parent=1 // pred_check_branch
      %35 = sbr.rel (0) target = $region13
    $region12: #{tpu_custom_call.1} parent=1 // pred_region
      %36 = dma.done [#allocation4], 256
    $region13: #{tpu_custom_call.1} parent=1 // pred_fallthru
      _
    // Predicated region
    $region14: #{tpu_custom_call.1} parent=1 // pred_check
      _
    $region15: #{tpu_custom_call.1} parent=1 // pred_check_branch
      %38 = sbr.rel (0) target = $region17
    $region16: #{tpu_custom_call.1} parent=1 // pred_region
      %39 = dma.done [#allocation7], 256
    $region17: #{tpu_custom_call.1} parent=1 // pred_fallthru
      _
    %p40 = scmp.eq.s32.totalorder 0, 0
    // Predicated region
    $region18: #{tpu_custom_call.1} parent=1 // pred_check
      %p41 = pneg %p40
    $region19: #{tpu_custom_call.1} parent=1 // pred_check_branch
      %43 = sbr.rel (%p41) target = $region21
    $region20: #{tpu_custom_call.1} parent=1 // pred_region
      %44 = vst [vmem:[#allocation2] sm:$0xff] 0.0
    $region21: #{tpu_custom_call.1} parent=1 // pred_fallthru
      _
    %v45 = vld [vmem:[#allocation6] sm:$0xff]
    %v46 = vld [vmem:[#allocation6 + $0x8] sm:$0xff]
    %v47 = vld [vmem:[#allocation3] sm:$0xff]
    %v48 = vld [vmem:[#allocation3 + $0x8] sm:$0xff]
    %v49 = vsub.f32 %v45, %v47
    %v50 = vsub.f32 %v46, %v48
    %v51 = vmul.f32 %v49, %v49
    %v52 = vmul.f32 %v50, %v50
    %v53 = vld [vmem:[#allocation2] sm:$0xff]
    %v54 = vadd.f32 %v51, %v52
    %v55 = vadd.f32 %v53, %v54
    %56 = vst [vmem:[#allocation2] sm:$0xff] %v55
    // Predicated region
    $region22: #{tpu_custom_call.1} parent=1 // pred_check
      %p57 = pneg %p40
    $region23: #{tpu_custom_call.1} parent=1 // pred_check_branch
      %59 = sbr.rel (%p57) target = $region25
    $region24: #{tpu_custom_call.1} parent=1 // pred_region
      %v60 = vld [vmem:[#allocation2] sm:$0xff]
      %61 = vadd.xlane.f32.xlu0 %v60
      %v62 = vpop.xlane.xlu0 %61
      %v63 = vrot.slane %v62, 4
      %v64 = vadd.f32 %v62, %v63
      %v65 = vrot.slane %v64, 2
      %v66 = vadd.f32 %v64, %v65
      %v67 = vrot.slane %v66, 1
      %v68 = vadd.f32 %v66, %v67
      %s69 = vtos %v68
      %s70 = smul.f32 %s69, 0.00048828125
      %v71 = vstv %s70
      %vm72 = vcmask 0
      %73 = vst.msk [vmem:[#allocation8] sm:$0x1] %vm72, %v71
    $region25: #{tpu_custom_call.1} parent=1 // pred_fallthru
      _
    // Predicated region
    $region26: #{tpu_custom_call.1} parent=1 // pred_check
      _
    $region27: #{tpu_custom_call.1} parent=1 // pred_check_branch
      %75 = sbr.rel (0) target = $region29
    $region28: #{tpu_custom_call.1} parent=1 // pred_region
      %s77 = ssub.s32 16, 16
      %78 = vsyncadd [#allocation5], %s77
      %s80 = sshll.u32 [#allocation8], 4
      %s81 = int_to_ptr.vmem [resolvable:$true] %s80
      %83 = dma.vmem_to_hbm [thread:$0]  %s81, 16, %s2, [#allocation5]
    $region29: #{tpu_custom_call.1} parent=1 // pred_fallthru
      _
    // Predicated region
    $region30: #{tpu_custom_call.1} parent=1 // pred_check
      _
    $region31: #{tpu_custom_call.1} parent=1 // pred_check_branch
      %85 = sbr.rel (0) target = $region33
    $region32: #{tpu_custom_call.1} parent=1 // pred_region
      %86 = dma.done [#allocation5], 16
    $region33: #{tpu_custom_call.1} parent=1 // pred_fallthru
      _
    %87 = vsyncpa [#allocation4], 1
    %88 = vsyncpa [#allocation7], 1
    %89 = vsyncpa [#allocation5], 1

</llo_original>
